<compile_context>
chip_gen: v6e
topology: v6e:2x2x1
jax: 0.10.0
libtpu: 0.0.40
codegen_flags: <defaults>
</compile_context>

<pallas_src>
import jax
import jax.numpy as jnp
from jax import lax
from jax.experimental import pallas as pl
from jax.experimental.pallas import tpu as pltpu


def _hidden_kernel(x_ref,    # (tm, H)   bf16: gathered masked rows
                   w1_ref,   # (H, Hd)   bf16, resident (constant index map)
                   b1_ref,   # (1, Hd)   f32, resident
                   h_ref):   # (tm, Hd)  bf16 output: normalized hidden
    # Linear(num_inputs -> num_hiddens) + ReLU  (native bf16 MXU, f32 accumulate)
    h = jnp.dot(x_ref[...], w1_ref[...],
                preferred_element_type=jnp.float32) + b1_ref[...]
    h = jnp.maximum(h, 0.0)
    # LayerNorm (torch defaults: eps=1e-5, biased variance).  The affine
    # gamma/beta are folded into w2/b2 in the wrapper.
    mean = jnp.mean(h, axis=-1, keepdims=True)
    var = jnp.mean((h - mean) ** 2, axis=-1, keepdims=True)
    h = (h - mean) * lax.rsqrt(var + 1e-5)
    h_ref[...] = h.astype(h_ref.dtype)


def _logits_kernel(h_ref,    # (tm, Hd)  bf16 hidden
                   w2_ref,   # (Hd, tv)  bf16, streamed along vocab (LN-gamma folded in)
                   b2_ref,   # (1, tv)   f32, streamed along vocab (LN-beta folded in)
                   out_ref): # (tm, tv)  logits tile (bf16 by default)
    y = jnp.dot(h_ref[...], w2_ref[...], preferred_element_type=jnp.float32)
    out_ref[...] = (y + b2_ref[...]).astype(out_ref.dtype)


def _round_up(x, m):
    return ((x + m - 1) // m) * m


def masklm_forward(x, pred_position, params, *,
                   row_tile=128, vocab_tile=2048, out_dtype=jnp.bfloat16):
    """x: [B, T, H] f32, pred_position: [B, P] int32 -> [B, P, V] out_dtype."""
    B, T, H = x.shape
    P = pred_position.shape[1]
    N = B * P
    w1, b1, gamma, beta, w2, b2 = params
    Hd, V = w2.shape
    assert vocab_tile % 128 == 0 and row_tile % 8 == 0

    # Fold LayerNorm affine into the second Linear (one-time param prep):
    #   (h*gamma + beta) @ w2 + b2 == h @ (gamma[:,None] * w2) + (beta @ w2 + b2)
    w2f = w2.astype(jnp.float32)
    w2_eff = (gamma.astype(jnp.float32)[:, None] * w2f).astype(jnp.bfloat16)
    b2_eff = (beta.astype(jnp.float32) @ w2f
              + b2.astype(jnp.float32)).reshape(1, V)

    # Tile sizes: shrink the row tile to the real work (N is often tiny for
    # masked LM); keep vocab tiles big so DMA per step >> pipeline overhead.
    tm = min(row_tile, _round_up(N, 8))
    tv = min(vocab_tile, _round_up(V, 128))
    n_pad = _round_up(N, tm)
    v_pad = _round_up(V, tv)

    if v_pad != V:  # pad vocab axis so it tiles evenly (sliced off below)
        w2_eff = jnp.pad(w2_eff, ((0, 0), (0, v_pad - V)))
        b2_eff = jnp.pad(b2_eff, ((0, 0), (0, v_pad - V)))

    # Masked-position gather in the wrapper (XLA): moves only N*H bytes and
    # lets the normal BlockSpec pipeline stream the gathered rows.
    batch_idx = jnp.repeat(jnp.arange(B, dtype=jnp.int32), P)
    flat_idx = batch_idx * T + pred_position.reshape(-1).astype(jnp.int32)
    masked_x = jnp.take(x.reshape(B * T, H), flat_idx, axis=0)
    masked_x = jnp.pad(masked_x, ((0, n_pad - N), (0, 0))).astype(jnp.bfloat16)

    w1_bf = w1.astype(jnp.bfloat16)
    b1_2d = b1.reshape(1, Hd).astype(jnp.float32)

    # ---- Stage 1: gather -> Linear1 + ReLU + LayerNorm -> bf16 hidden -------
    h = pl.pallas_call(
        _hidden_kernel,
        out_shape=jax.ShapeDtypeStruct((n_pad, Hd), jnp.bfloat16),
        grid_spec=pltpu.PrefetchScalarGridSpec(
            num_scalar_prefetch=0,
            grid=(n_pad // tm,),
            in_specs=[
                pl.BlockSpec((tm, H), lambda i: (i, 0)),    # gathered rows
                pl.BlockSpec((H, Hd), lambda i: (0, 0)),    # w1 (resident)
                pl.BlockSpec((1, Hd), lambda i: (0, 0)),    # b1 (resident)
            ],
            out_specs=pl.BlockSpec((tm, Hd), lambda i: (i, 0)),
        ),
        compiler_params=pltpu.CompilerParams(
            dimension_semantics=("parallel",),
            vmem_limit_bytes=32 * 1024 * 1024,
        ),
    )(masked_x, w1_bf, b1_2d)

    # ---- Stage 2: hidden @ w2_eff + b2_eff, streamed over vocab tiles -------
    # No carried scratch -> both axes independent -> both "parallel", so the
    # vocab stream can shard across TensorCores on v7x even with 1 row tile.
    logits = pl.pallas_call(
        _logits_kernel,
        out_shape=jax.ShapeDtypeStruct((n_pad, v_pad), out_dtype),
        grid_spec=pltpu.PrefetchScalarGridSpec(
            num_scalar_prefetch=0,
            grid=(n_pad // tm, v_pad // tv),
            in_specs=[
                pl.BlockSpec((tm, Hd), lambda i, j: (i, 0)),   # hidden
                pl.BlockSpec((Hd, tv), lambda i, j: (0, j)),   # w2 (streamed)
                pl.BlockSpec((1, tv), lambda i, j: (0, j)),    # b2 (streamed)
            ],
            out_specs=pl.BlockSpec((tm, tv), lambda i, j: (i, j)),
        ),
        compiler_params=pltpu.CompilerParams(
            dimension_semantics=("parallel", "parallel"),
            vmem_limit_bytes=32 * 1024 * 1024,
        ),
    )(h, w2_eff, b2_eff)

    return logits[:N, :V].reshape(B, P, V)


def _reference(x, pred_position, params):
    """Pure-JAX f32 reference matching the PyTorch forward."""
    w1, b1, gamma, beta, w2, b2 = params
    B, T, H = x.shape
    P = pred_position.shape[1]
    batch_idx = jnp.repeat(jnp.arange(B), P)
    masked_x = x[batch_idx, pred_position.reshape(-1)].reshape(B, P, H)
    h = masked_x @ w1 + b1
    h = jnp.maximum(h, 0.0)
    mean = jnp.mean(h, axis=-1, keepdims=True)
    var = jnp.mean((h - mean) ** 2, axis=-1, keepdims=True)
    h = (h - mean) / jnp.sqrt(var + 1e-5) * gamma + beta
    return h @ w2 + b2


if __name__ == "__main__":
    # Small shapes consistent with the module's forward (aligned to TPU tiles).
    B, T = 2, 16
    num_inputs = 256      # H
    num_hiddens = 128     # Hd
    vocab_size = 4096     # V  (2 vocab tiles of 2048 -> exercises the streamed grid)
    P = 4                 # num_pred_positions  (N = B*P = 8 -> exercises shrunk tm)

    key = jax.random.PRNGKey(0)
    kx, kp, k1, k2, k3, k4, k5 = jax.random.split(key, 7)

    x = jax.random.normal(kx, (B, T, num_inputs), dtype=jnp.float32)
    pred_position = jax.random.randint(kp, (B, P), 0, T, dtype=jnp.int32)

    w1 = jax.random.normal(k1, (num_inputs, num_hiddens), jnp.float32) * 0.02
    b1 = jnp.zeros((num_hiddens,), jnp.float32)
    gamma = 1.0 + 0.1 * jax.random.normal(k4, (num_hiddens,), jnp.float32)
    beta = 0.05 * jax.random.normal(k5, (num_hiddens,), jnp.float32)
    w2 = jax.random.normal(k2, (num_hiddens, vocab_size), jnp.float32) * 0.02
    b2 = jax.random.normal(k3, (vocab_size,), jnp.float32) * 0.01
    params = (w1, b1, gamma, beta, w2, b2)

    # bf16 logits by default (perf); pass out_dtype=jnp.float32 if the
    # downstream loss needs full-precision logits.
    y = masklm_forward(x, pred_position, params)
    y = jax.block_until_ready(y)

    y_ref = _reference(x, pred_position, params)
    assert y.shape == (B, P, vocab_size)
    # bf16 inputs/weights/output (f32 accumulation) -> looser tolerance than pure-f32.
    err = jnp.max(jnp.abs(y.astype(jnp.float32) - y_ref))
    assert jnp.allclose(y.astype(jnp.float32), y_ref, atol=2e-2, rtol=2e-2), (
        f"mismatch vs reference, max abs err = {err}")

    print("KERNEL_OK")
</pallas_src>

<mosaic_0001>
module attributes {stable_mosaic.version = 11 : i64} {
  func.func @_hidden_kernel(%arg0: i32, %arg1: memref<8x256xbf16, #tpu.memory_space<vmem>>, %arg2: memref<256x128xbf16, #tpu.memory_space<vmem>>, %arg3: memref<1x128xf32, #tpu.memory_space<vmem>>, %arg4: memref<8x128xbf16, #tpu.memory_space<vmem>>) attributes {dimension_semantics = [#tpu.dimension_semantics<parallel>], iteration_bounds = array<i64: 1>, scalar_prefetch = 0 : i64, scratch_operands = 0 : i64, tpu.core_type = #tpu.core_type<tc>, window_params = [{transform_indices = @transform_0, window_bounds = array<i64: 8, 256>}, {pipeline_mode = #tpu.pipeline_mode<synchronous>, transform_indices = @transform_1, window_bounds = array<i64: 256, 128>}, {pipeline_mode = #tpu.pipeline_mode<synchronous>, transform_indices = @transform_2, window_bounds = array<i64: 1, 128>}, {transform_indices = @transform_3, window_bounds = array<i64: 8, 128>}]} {
    %c0 = arith.constant 0 : index
    %c0_0 = arith.constant 0 : index
    %0 = vector.load %arg1[%c0, %c0_0] : memref<8x256xbf16, #tpu.memory_space<vmem>>, vector<8x256xbf16>
    %c0_1 = arith.constant 0 : index
    %c0_2 = arith.constant 0 : index
    %1 = vector.load %arg2[%c0_1, %c0_2] : memref<256x128xbf16, #tpu.memory_space<vmem>>, vector<256x128xbf16>
    %cst = arith.constant dense<0.000000e+00> : vector<8x128xf32>
    %2 = tpu.matmul %0, %1, %cst {dimension_numbers = #tpu.dot_dimension_numbers<[1], [0], [0], [1], [0, 0, 1, 1], [], []>} : vector<8x256xbf16>, vector<256x128xbf16>, vector<8x128xf32> -> vector<8x128xf32>
    %c0_3 = arith.constant 0 : index
    %c0_4 = arith.constant 0 : index
    %3 = vector.load %arg3[%c0_3, %c0_4] : memref<1x128xf32, #tpu.memory_space<vmem>>, vector<1x128xf32>
    %4 = vector.broadcast %3 : vector<1x128xf32> to vector<8x128xf32>
    %5 = arith.addf %2, %4 : vector<8x128xf32>
    %cst_5 = arith.constant 0.000000e+00 : f32
    %6 = vector.broadcast %cst_5 : f32 to vector<8x128xf32>
    %7 = arith.maximumf %5, %6 : vector<8x128xf32>
    %cst_6 = arith.constant dense<0.000000e+00> : vector<8xf32>
    %8 = vector.multi_reduction <add>, %7, %cst_6 [1] : vector<8x128xf32> to vector<8xf32>
    %9 = vector.shape_cast %8 : vector<8xf32> to vector<8x1xf32>
    %cst_7 = arith.constant 1.280000e+02 : f32
    %10 = vector.broadcast %cst_7 : f32 to vector<8x1xf32>
    %11 = arith.divf %9, %10 : vector<8x1xf32>
    %12 = vector.broadcast %11 : vector<8x1xf32> to vector<8x128xf32>
    %13 = arith.subf %7, %12 : vector<8x128xf32>
    %14 = arith.mulf %13, %13 : vector<8x128xf32>
    %cst_8 = arith.constant dense<0.000000e+00> : vector<8xf32>
    %15 = vector.multi_reduction <add>, %14, %cst_8 [1] : vector<8x128xf32> to vector<8xf32>
    %16 = vector.shape_cast %15 : vector<8xf32> to vector<8x1xf32>
    %cst_9 = arith.constant 1.280000e+02 : f32
    %17 = vector.broadcast %cst_9 : f32 to vector<8x1xf32>
    %18 = arith.divf %16, %17 : vector<8x1xf32>
    %19 = vector.broadcast %11 : vector<8x1xf32> to vector<8x128xf32>
    %20 = arith.subf %7, %19 : vector<8x128xf32>
    %cst_10 = arith.constant 9.99999974E-6 : f32
    %21 = vector.broadcast %cst_10 : f32 to vector<8x1xf32>
    %22 = arith.addf %18, %21 : vector<8x1xf32>
    %23 = math.rsqrt %22 : vector<8x1xf32>
    %24 = vector.broadcast %23 : vector<8x1xf32> to vector<8x128xf32>
    %25 = arith.mulf %20, %24 : vector<8x128xf32>
    %26 = arith.truncf %25 : vector<8x128xf32> to vector<8x128xbf16>
    %c0_11 = arith.constant 0 : index
    %c0_12 = arith.constant 0 : index
    %27 = vector.load %arg4[%c0_11, %c0_12] : memref<8x128xbf16, #tpu.memory_space<vmem>>, vector<8x128xbf16>
    tpu.vector_store %arg4[%c0_11, %c0_12], %26 {strides = array<i32>} : memref<8x128xbf16, #tpu.memory_space<vmem>>, vector<8x128xbf16>,
    return
  }
  func.func @transform_0(%arg0: i32) -> (i32, i32) {
    %c0_i32 = arith.constant 0 : i32
    %c0_i32_0 = arith.constant 0 : i32
    return %arg0, %c0_i32 : i32, i32
  }
  func.func @transform_1(%arg0: i32) -> (i32, i32) {
    %c0_i32 = arith.constant 0 : i32
    %c0_i32_0 = arith.constant 0 : i32
    %c0_i32_1 = arith.constant 0 : i32
    return %c0_i32, %c0_i32_0 : i32, i32
  }
  func.func @transform_2(%arg0: i32) -> (i32, i32) {
    %c0_i32 = arith.constant 0 : i32
    %c0_i32_0 = arith.constant 0 : i32
    %c0_i32_1 = arith.constant 0 : i32
    return %c0_i32, %c0_i32_0 : i32, i32
  }
  func.func @transform_3(%arg0: i32) -> (i32, i32) {
    %c0_i32 = arith.constant 0 : i32
    %c0_i32_0 = arith.constant 0 : i32
    return %arg0, %c0_i32 : i32, i32
  }
}

</mosaic_0001>

<llo_original>
// kernel: tpu_custom_call.1
$region0: #{tpu_custom_call.1}
  #allocation0 [shape = 'u32[]', space=smem, size = 0x4, offset = 0x4, fixed_abs, tag = 'smem constant byte address 0x4 - core index']
  #allocation1 [shape = 'u32[144,128]{1,0:T(1,128)}', space=vmem, size = 0x12000, scoped, tag = 'internal scratch']
  %s0 = inlined_call_operand.hbm [shape: bf16[8,256], index: 0, kind: input, shape index: {}]
  %s1 = inlined_call_operand.hbm [shape: bf16[256,128], index: 1, kind: input, shape index: {}]
  %s2 = inlined_call_operand.vmem [shape: f32[1,128], index: 2, kind: input, shape index: {}]
  %s3 = inlined_call_operand.hbm [shape: bf16[8,128], index: 3, kind: output, shape index: {}]
  %s4 = sld [smem:[#allocation0]]
  $region30: #{tpu_custom_call.1} parent=0
    _
  %s6 = ssub.s32 1, %s4
  %s7 = scalar_select 0, %s6, %s4
  $region1: #{tpu_custom_call.1} parent=0
    #allocation2 [shape = 'u8[4096]{0}', space=vmem, size = 0x1000, scoped, tag = 'input window, operand 0, single buffered']
    #allocation3 [shape = 's32[1]{0}', space=sflag, size = 0x4, scoped, tag = 'scoped memory for tpu_custom_call.1']
    #allocation4 [shape = 's32[1]{0}', space=sflag, size = 0x4, scoped, tag = 'scoped memory for tpu_custom_call.1']
    #allocation5 [shape = 'u8[65536]{0}', space=vmem, size = 0x10000, scoped, tag = 'input window, operand 1, single buffered']
    #allocation6 [shape = 's32[1]{0}', space=sflag, size = 0x4, scoped, tag = 'scoped memory for tpu_custom_call.1']
    #allocation7 [shape = 'u8[2048]{0}', space=vmem, size = 0x800, scoped, tag = 'output window, operand 0, single buffered']
    %8 = vsyncpa [#allocation3], 0
    %9 = vsyncpa [#allocation6], 0
    %10 = vsyncpa [#allocation4], 0
    // Predicated region
    $region2: #{tpu_custom_call.1} parent=1 // pred_check
      _
    $region3: #{tpu_custom_call.1} parent=1 // pred_check_branch
      %12 = sbr.rel (0) target = $region5
    $region4: #{tpu_custom_call.1} parent=1 // pred_region
      %s14 = ssub.s32 128, 128
      %15 = vsyncadd [#allocation3], %s14
      %s17 = sshll.u32 [#allocation2], 4
      %s18 = int_to_ptr.vmem [resolvable:$true] %s17
      %20 = dma.hbm_to_vmem [thread:$0]  %s0, 128, %s18, [#allocation3]
    $region5: #{tpu_custom_call.1} parent=1 // pred_fallthru
      _
    // Predicated region
    $region6: #{tpu_custom_call.1} parent=1 // pred_check
      _
    $region7: #{tpu_custom_call.1} parent=1 // pred_check_branch
      %22 = sbr.rel (0) target = $region9
    $region8: #{tpu_custom_call.1} parent=1 // pred_region
      %s24 = ssub.s32 2048, 2048
      %25 = vsyncadd [#allocation6], %s24
      %s26 = sshll.u32 [#allocation5], 4
      %s27 = int_to_ptr.vmem [resolvable:$true] %s26
      %32 = dma.hbm_to_vmem [thread:$0]  %s1, 2048, %s27, [#allocation6], 64, 64, 4
    $region9: #{tpu_custom_call.1} parent=1 // pred_fallthru
      _
    // Predicated region
    $region10: #{tpu_custom_call.1} parent=1 // pred_check
      _
    $region11: #{tpu_custom_call.1} parent=1 // pred_check_branch
      %34 = sbr.rel (0) target = $region13
    $region12: #{tpu_custom_call.1} parent=1 // pred_region
      _
    $region13: #{tpu_custom_call.1} parent=1 // pred_fallthru
      _
    // Predicated region
    $region14: #{tpu_custom_call.1} parent=1 // pred_check
      _
    $region15: #{tpu_custom_call.1} parent=1 // pred_check_branch
      %36 = sbr.rel (0) target = $region17
    $region16: #{tpu_custom_call.1} parent=1 // pred_region
      %37 = dma.done [#allocation3], 128
    $region17: #{tpu_custom_call.1} parent=1 // pred_fallthru
      _
    // Predicated region
    $region18: #{tpu_custom_call.1} parent=1 // pred_check
      _
    $region19: #{tpu_custom_call.1} parent=1 // pred_check_branch
      %39 = sbr.rel (0) target = $region21
    $region20: #{tpu_custom_call.1} parent=1 // pred_region
      %40 = dma.done [#allocation6], 2048
    $region21: #{tpu_custom_call.1} parent=1 // pred_fallthru
      _
    %v42 = vld [vmem:[#allocation2] sm:$0xff]
    %v43 = vld [vmem:[#allocation5] sm:$0xf]
    %v44 = vld [vmem:[#allocation5 + $0x4] sm:$0xf]
    %v45 = vld [vmem:[#allocation5 + $0x8] sm:$0xf]
    %v46 = vld [vmem:[#allocation5 + $0xc] sm:$0xf]
    %v47 = vld [vmem:[#allocation5 + $0x10] sm:$0xf]
    %v48 = vld [vmem:[#allocation5 + $0x14] sm:$0xf]
    %v49 = vld [vmem:[#allocation5 + $0x18] sm:$0xf]
    %v50 = vld [vmem:[#allocation5 + $0x1c] sm:$0xf]
    %v51 = vld [vmem:[#allocation5 + $0x20] sm:$0xf]
    %v52 = vld [vmem:[#allocation5 + $0x24] sm:$0xf]
    %v53 = vld [vmem:[#allocation5 + $0x28] sm:$0xf]
    %v54 = vld [vmem:[#allocation5 + $0x2c] sm:$0xf]
    %v55 = vld [vmem:[#allocation5 + $0x30] sm:$0xf]
    %v56 = vld [vmem:[#allocation5 + $0x34] sm:$0xf]
    %v57 = vld [vmem:[#allocation5 + $0x38] sm:$0xf]
    %v58 = vld [vmem:[#allocation5 + $0x3c] sm:$0xf]
    %v59 = vld [vmem:[#allocation5 + $0x40] sm:$0xf]
    %v60 = vld [vmem:[#allocation5 + $0x44] sm:$0xf]
    %v61 = vld [vmem:[#allocation5 + $0x48] sm:$0xf]
    %v62 = vld [vmem:[#allocation5 + $0x4c] sm:$0xf]
    %v63 = vld [vmem:[#allocation5 + $0x50] sm:$0xf]
    %v64 = vld [vmem:[#allocation5 + $0x54] sm:$0xf]
    %v65 = vld [vmem:[#allocation5 + $0x58] sm:$0xf]
    %v66 = vld [vmem:[#allocation5 + $0x5c] sm:$0xf]
    %v67 = vld [vmem:[#allocation5 + $0x60] sm:$0xf]
    %v68 = vld [vmem:[#allocation5 + $0x64] sm:$0xf]
    %v69 = vld [vmem:[#allocation5 + $0x68] sm:$0xf]
    %v70 = vld [vmem:[#allocation5 + $0x6c] sm:$0xf]
    %v71 = vld [vmem:[#allocation5 + $0x70] sm:$0xf]
    %v72 = vld [vmem:[#allocation5 + $0x74] sm:$0xf]
    %v73 = vld [vmem:[#allocation5 + $0x78] sm:$0xf]
    %v74 = vld [vmem:[#allocation5 + $0x7c] sm:$0xf]
    %v75 = vld [vmem:[%s2] sm:$0x1]
    %v77 = vlaneseq
    %v78 = vshrl.u32 %v77, 7
    %v79 = vsub.s32 0, %v78
    %v80 = vrot.slane %v75, %v79
    %v83 = vunpack.c.l.b16 %v42
    %v84 = vunpack.c.h.b16 %v42
    %v85 = vpack.c.b16 %v83, %v83
    %v86 = vpack.c.b16 %v84, %v84
    %v121 = vunpack.c.l.b16 %v43
    %v122 = vunpack.c.l.b16 %v44
    %v123 = vunpack.c.l.b16 %v45
    %v124 = vunpack.c.l.b16 %v46
    %v125 = vunpack.c.l.b16 %v47
    %v126 = vunpack.c.l.b16 %v48
    %v127 = vunpack.c.l.b16 %v49
    %v128 = vunpack.c.l.b16 %v50
    %v129 = vunpack.c.l.b16 %v51
    %v130 = vunpack.c.l.b16 %v52
    %v131 = vunpack.c.l.b16 %v53
    %v132 = vunpack.c.l.b16 %v54
    %v133 = vunpack.c.l.b16 %v55
    %v134 = vunpack.c.l.b16 %v56
    %v135 = vunpack.c.l.b16 %v57
    %v136 = vunpack.c.l.b16 %v58
    %v137 = vunpack.c.l.b16 %v59
    %v138 = vunpack.c.l.b16 %v60
    %v139 = vunpack.c.l.b16 %v61
    %v140 = vunpack.c.l.b16 %v62
    %v141 = vunpack.c.l.b16 %v63
    %v142 = vunpack.c.l.b16 %v64
    %v143 = vunpack.c.l.b16 %v65
    %v144 = vunpack.c.l.b16 %v66
    %v145 = vunpack.c.l.b16 %v67
    %v146 = vunpack.c.l.b16 %v68
    %v147 = vunpack.c.l.b16 %v69
    %v148 = vunpack.c.l.b16 %v70
    %v149 = vunpack.c.l.b16 %v71
    %v150 = vunpack.c.l.b16 %v72
    %v151 = vunpack.c.l.b16 %v73
    %v152 = vunpack.c.l.b16 %v74
    %v153 = vpack.c.b16 %v122, %v121
    %v154 = vpack.c.b16 %v124, %v123
    %v155 = vpack.c.b16 %v126, %v125
    %v156 = vpack.c.b16 %v128, %v127
    %v157 = vpack.c.b16 %v130, %v129
    %v158 = vpack.c.b16 %v132, %v131
    %v159 = vpack.c.b16 %v134, %v133
    %v160 = vpack.c.b16 %v136, %v135
    %v161 = vpack.c.b16 %v138, %v137
    %v162 = vpack.c.b16 %v140, %v139
    %v163 = vpack.c.b16 %v142, %v141
    %v164 = vpack.c.b16 %v144, %v143
    %v165 = vpack.c.b16 %v146, %v145
    %v166 = vpack.c.b16 %v148, %v147
    %v167 = vpack.c.b16 %v150, %v149
    %v168 = vpack.c.b16 %v152, %v151
    %185 = vmatprep.subr.bf16.mxu0 0
    %186 = vmatpush1.bf16.msra.mxu0 %v160
    %187 = vmatprep.subr.bf16.mxu0 0
    %188 = vmatpush1.bf16.msra.mxu0 %v159
    %189 = vmatprep.subr.bf16.mxu0 0
    %190 = vmatpush1.bf16.msra.mxu0 %v158
    %191 = vmatprep.subr.bf16.mxu0 0
    %192 = vmatpush1.bf16.msra.mxu0 %v157
    %193 = vmatprep.subr.bf16.mxu0 0
    %194 = vmatpush1.bf16.msra.mxu0 %v156
    %195 = vmatprep.subr.bf16.mxu0 0
    %196 = vmatpush1.bf16.msra.mxu0 %v155
    %197 = vmatprep.subr.bf16.mxu0 0
    %198 = vmatpush1.bf16.msra.mxu0 %v154
    %199 = vmatprep.subr.bf16.mxu0 0
    %200 = vmatpush1.bf16.msra.mxu0 %v153
    %201 = vmatprep.subr.bf16.mxu0 0
    %202 = vmatpush2.bf16.msra.mxu0 %v168
    %203 = vmatprep.subr.bf16.mxu0 0
    %204 = vmatpush2.bf16.msra.mxu0 %v167
    %205 = vmatprep.subr.bf16.mxu0 0
    %206 = vmatpush2.bf16.msra.mxu0 %v166
    %207 = vmatprep.subr.bf16.mxu0 0
    %208 = vmatpush2.bf16.msra.mxu0 %v165
    %209 = vmatprep.subr.bf16.mxu0 0
    %210 = vmatpush2.bf16.msra.mxu0 %v164
    %211 = vmatprep.subr.bf16.mxu0 0
    %212 = vmatpush2.bf16.msra.mxu0 %v163
    %213 = vmatprep.subr.bf16.mxu0 0
    %214 = vmatpush2.bf16.msra.mxu0 %v162
    %215 = vmatprep.subr.bf16.mxu0 0
    %216 = vmatpush2.bf16.msra.mxu0 %v161
    %217 = vmatprep.mubr.bf16.mxu0 %v86
    %218 = vmatmul.mubr.bf16.gmra.mxu0 %v85
    %v219 = vpop.f32.mrf.mxu0
    %v220 = vadd.f32 %v80, %v219
    %v221 = vpop.f32.mrf.mxu0
    %v222 = vpop.f32.mrf.mxu0
    %v223 = vpop.f32.mrf.mxu0
    %224 = vdwg.mxu0
    %v225 = vmax.f32 %v220, 0.0
    %226 = vadd.xlane.f32.xlu0 %v225
    %v227 = vpop.xlane.xlu0 %226
    %v228 = vrcp.pop 128.0
    %v229 = vmul.f32 %v227, %v228
    %v230 = vsub.f32 %v225, %v229
    %v231 = vmul.f32 %v230, %v230
    %232 = vadd.xlane.f32.xlu0 %v231
    %v233 = vpop.xlane.xlu0 %232
    %v234 = vmul.f32 %v233, %v228
    %v235 = vadd.f32 %v234, 1e-05
    %v236 = vrsqrt.pop %v235
    %v237 = vmul.f32 %v230, %v236
    %v238 = vpack.c.bf16 %v237, %v237
    %239 = vst [vmem:[#allocation7] sm:$0xf] %v238
    // Predicated region
    $region22: #{tpu_custom_call.1} parent=1 // pred_check
      _
    $region23: #{tpu_custom_call.1} parent=1 // pred_check_branch
      %241 = sbr.rel (0) target = $region25
    $region24: #{tpu_custom_call.1} parent=1 // pred_region
      %s243 = ssub.s32 64, 64
      %244 = vsyncadd [#allocation4], %s243
      %s246 = sshll.u32 [#allocation7], 4
      %s247 = int_to_ptr.vmem [resolvable:$true] %s246
      %249 = dma.vmem_to_hbm [thread:$0]  %s247, 64, %s3, [#allocation4]
    $region25: #{tpu_custom_call.1} parent=1 // pred_fallthru
      _
    // Predicated region
    $region26: #{tpu_custom_call.1} parent=1 // pred_check
      _
    $region27: #{tpu_custom_call.1} parent=1 // pred_check_branch
      %251 = sbr.rel (0) target = $region29
    $region28: #{tpu_custom_call.1} parent=1 // pred_region
      %252 = dma.done [#allocation4], 64
    $region29: #{tpu_custom_call.1} parent=1 // pred_fallthru
      _
    %253 = vsyncpa [#allocation3], 1
    %254 = vsyncpa [#allocation6], 1
    %255 = vsyncpa [#allocation4], 1

</llo_original>
